<compile_context>
chip_gen: v7x
topology: tpu7x:2x2x1
jax: 0.10.0
libtpu: 0.0.40
codegen_flags: <defaults>
</compile_context>

<pallas_src>
import functools

import jax
import jax.numpy as jnp
from jax.experimental import pallas as pl
from jax.experimental.pallas import tpu as pltpu

_INV_SQRT2 = 0.7071067811865476


def _round_up(x, m):
    return ((x + m - 1) // m) * m


def conv_mlp_kernel(x_ref, w1_ref, b1_ref, w2_ref, b2_ref, o_ref, acc_ref, *,
                    bn, chunks):
    """Per-grid-step body: (bn, Cin, TM) activation slab -> (bn, Cout, TM) output.

    x_ref : (bn, Cin, TM)  pixels lane-dense, channels on sublanes
    w1_ref: (Ch, Cin)      fc1 weight, compute dtype, VMEM-resident
    b1_ref: (Ch, 1)        fc1 bias, f32
    w2_ref: (Cout, Ch)     fc2 weight, compute dtype
    b2_ref: (Cout, 1)      fc2 bias, f32
    o_ref : (bn, Cout, TM)
    acc_ref: (bn, Cout, TM) f32 VMEM scratch accumulator
    chunks: static tuple of (start, stop) chunk bounds over the hidden dim Ch
    """
    cdt = w1_ref.dtype
    b2 = b2_ref[...]                                     # (Cout, 1) f32
    for b in range(bn):                                  # static, small unroll
        xb = x_ref[b].astype(cdt)                        # (Cin, TM)
        for ci, (c0, c1) in enumerate(chunks):           # static hidden-dim chunks:
            # bounded (chunk, TM) intermediate instead of the full (Ch, TM) slab
            h = jnp.dot(w1_ref[c0:c1, :], xb,
                        preferred_element_type=jnp.float32) + b1_ref[c0:c1, :]
            # exact erf GELU in f32 == torch.nn.GELU(approximate='none')
            h = 0.5 * h * (1.0 + jax.lax.erf(h * jnp.float32(_INV_SQRT2)))
            part = jnp.dot(w2_ref[:, c0:c1], h.astype(cdt),
                           preferred_element_type=jnp.float32)
            if ci == 0:
                acc_ref[b] = part
            else:
                acc_ref[b] = acc_ref[b] + part
        # Dropout(p=0.0) is the identity in forward -> omitted.
        o_ref[b] = (acc_ref[b] + b2).astype(o_ref.dtype)


def _vmem_limit_bytes(frac=0.70, fallback=48 * 1024 * 1024):
    """Scoped-VMEM budget with headroom: ~45 MiB on v7x (64 MiB physical),
    ~90 MiB on v5e/v6e (128 MiB physical). Fallback is safe on all generations."""
    try:
        cap = getattr(pltpu.get_tpu_info(), "vmem_capacity_bytes", None)
        if cap:
            return int(cap * frac)
    except Exception:
        pass
    return fallback


def conv_mlp_pallas(x_nchw, w1, b1, w2, b2, *, tm=512, ch_chunk=512,
                    compute_dtype=jnp.bfloat16, single_buffer_weights=True):
    """ConvMlp forward: y = conv1x1_2(GELU(conv1x1_1(x))), NCHW layout preserved.

    x_nchw: (N, Cin, H, W)  (pass bf16 here to halve HBM traffic; output dtype
                             follows input dtype -- most valuable on v5e/v6e)
    w1:     (Ch, Cin)    torch Conv2d(in, hidden, 1).weight squeezed to (out, in)
    b1:     (Ch,)
    w2:     (Cout, Ch)   torch Conv2d(hidden, out, 1).weight squeezed
    b2:     (Cout,)
    """
    N, Cin, H, W = x_nchw.shape
    Ch = w1.shape[0]
    Cout = w2.shape[0]
    HW = H * W

    # (N, Cin, H, W) -> (N, Cin, H*W): trailing-dim reshape, no data movement.
    x3d = x_nchw.reshape(N, Cin, HW)

    # ---- lane tiling over pixels + multi-image blocking for small feature maps ----
    lanes_target = max(128, (int(tm) // 128) * 128)      # sweep up to 1024 on v6e
    hw_lanes = _round_up(HW, 128)
    tm_hw = min(lanes_target, hw_lanes)                  # lane tile, multiple of 128
    n_hw = pl.cdiv(HW, tm_hw)
    if n_hw == 1:
        # Whole image fits in one lane tile: block several images per grid step
        # so each step / DMA still moves ~lanes_target lanes of work.
        bn = max(1, min(N, lanes_target // hw_lanes, 8))
        if N > 1:
            bn = min(bn, -(-N // 2))    # keep >=2 grid steps for the 2 v7x cores
    else:
        bn = 1
    nb = pl.cdiv(N, bn)

    # ---- static hidden-dim chunking (bounds the (chunk, TM) intermediate) ----
    tk = max(128, (int(ch_chunk) // 128) * 128)
    chunks = tuple((c, min(c + tk, Ch)) for c in range(0, Ch, tk))

    # Weights cast once; biases stay f32 (added to the f32 accumulator).
    w1c = w1.astype(compute_dtype)
    w2c = w2.astype(compute_dtype)
    b1c = b1.reshape(Ch, 1).astype(jnp.float32)
    b2c = b2.reshape(Cout, 1).astype(jnp.float32)

    m = N * HW
    cost = pl.CostEstimate(
        flops=2 * m * (Cin * Ch + Ch * Cout),
        transcendentals=m * Ch,
        bytes_accessed=(x3d.size * x3d.dtype.itemsize
                        + N * Cout * HW * x_nchw.dtype.itemsize
                        + w1c.size * w1c.dtype.itemsize
                        + w2c.size * w2c.dtype.itemsize
                        + (Ch + Cout) * 4),
    )

    kernel = functools.partial(conv_mlp_kernel, bn=bn, chunks=chunks)

    def build(single_buf):
        # Whole-array resident weights/biases: constant index map -> fetched once.
        # Single-buffer them (no dead second VMEM copy) when supported.
        # TODO(synk): for hidden dims whose weights exceed the VMEM budget, switch
        # to a third 'arbitrary' grid axis that streams Ch chunks from HBM.
        wkw = {"pipeline_mode": pl.Buffered(1)} if single_buf else {}
        grid_spec = pltpu.PrefetchScalarGridSpec(
            num_scalar_prefetch=0,
            grid=(nb, n_hw),
            in_specs=[
                pl.BlockSpec((bn, Cin, tm_hw), lambda i, j: (i, 0, j)),
                pl.BlockSpec((Ch, Cin), lambda i, j: (0, 0), **wkw),
                pl.BlockSpec((Ch, 1), lambda i, j: (0, 0), **wkw),
                pl.BlockSpec((Cout, Ch), lambda i, j: (0, 0), **wkw),
                pl.BlockSpec((Cout, 1), lambda i, j: (0, 0), **wkw),
            ],
            out_specs=pl.BlockSpec((bn, Cout, tm_hw), lambda i, j: (i, 0, j)),
            scratch_shapes=[pltpu.VMEM((bn, Cout, tm_hw), jnp.float32)],
        )
        return pl.pallas_call(
            kernel,
            out_shape=jax.ShapeDtypeStruct((N, Cout, HW), x_nchw.dtype),
            grid_spec=grid_spec,
            compiler_params=pltpu.CompilerParams(
                dimension_semantics=("parallel", "parallel"),
                vmem_limit_bytes=_vmem_limit_bytes(),
            ),
            cost_estimate=cost,
        )

    args = (x3d, w1c, b1c, w2c, b2c)
    try:
        out3d = build(single_buffer_weights)(*args)
    except Exception:
        if not single_buffer_weights:
            raise
        out3d = build(False)(*args)   # fallback: jax without pipeline_mode support

    # (N, Cout, H*W) -> (N, Cout, H, W): pure reshape, no transpose.
    return out3d.reshape(N, Cout, H, W)


def reference_conv_mlp(x_nchw, w1, b1, w2, b2):
    # Pure-JAX f32 reference of the PyTorch forward (1x1 convs == per-pixel MLP).
    x = x_nchw.astype(jnp.float32)
    h = (jnp.einsum("nchw,dc->ndhw", x, w1.astype(jnp.float32))
         + b1.astype(jnp.float32)[None, :, None, None])
    h = 0.5 * h * (1.0 + jax.lax.erf(h * _INV_SQRT2))
    y = (jnp.einsum("ndhw,ed->nehw", h, w2.astype(jnp.float32))
         + b2.astype(jnp.float32)[None, :, None, None])
    return y.astype(x_nchw.dtype)


if __name__ == "__main__":
    key = jax.random.PRNGKey(0)
    (kx, kw1, kb1, kw2, kb2,
     kx2, kw3, kb3, kw4, kb4) = jax.random.split(key, 10)

    # --- primary shapes: batch=2, channels=4, 16x16 spatial, hidden=32 ---
    N, Cin, H, W = 2, 4, 16, 16
    hidden, Cout = 32, 4   # out_features defaults to in_features
    x = jax.random.normal(kx, (N, Cin, H, W), dtype=jnp.float32)
    w1 = jax.random.normal(kw1, (hidden, Cin), dtype=jnp.float32) * 0.1
    b1 = jax.random.normal(kb1, (hidden,), dtype=jnp.float32) * 0.1
    w2 = jax.random.normal(kw2, (Cout, hidden), dtype=jnp.float32) * 0.1
    b2 = jax.random.normal(kb2, (Cout,), dtype=jnp.float32) * 0.1

    ref = reference_conv_mlp(x, w1, b1, w2, b2)

    # Exactness check: f32 MXU operands.
    out_f32 = jax.block_until_ready(
        conv_mlp_pallas(x, w1, b1, w2, b2, compute_dtype=jnp.float32))
    assert out_f32.shape == (N, Cout, H, W), out_f32.shape
    assert jnp.allclose(out_f32, ref, atol=1e-4, rtol=1e-4), \
        float(jnp.max(jnp.abs(out_f32 - ref)))

    # Default fast path: bf16 MXU operands with f32 accumulation.
    out_bf = jax.block_until_ready(conv_mlp_pallas(x, w1, b1, w2, b2))
    assert out_bf.shape == (N, Cout, H, W), out_bf.shape
    assert jnp.allclose(out_bf, ref, atol=3e-2, rtol=3e-2), \
        float(jnp.max(jnp.abs(out_bf - ref)))

    # --- exercise the multi-image block (bn=2) + chunked hidden-dim path ---
    N2, Cin2, hidden2, Cout2 = 4, 8, 192, 8
    x2 = jax.random.normal(kx2, (N2, Cin2, H, W), dtype=jnp.float32)
    w3 = jax.random.normal(kw3, (hidden2, Cin2), dtype=jnp.float32) * 0.1
    b3 = jax.random.normal(kb3, (hidden2,), dtype=jnp.float32) * 0.1
    w4 = jax.random.normal(kw4, (Cout2, hidden2), dtype=jnp.float32) * 0.1
    b4 = jax.random.normal(kb4, (Cout2,), dtype=jnp.float32) * 0.1
    ref2 = reference_conv_mlp(x2, w3, b3, w4, b4)
    out2 = jax.block_until_ready(
        conv_mlp_pallas(x2, w3, b3, w4, b4,
                        compute_dtype=jnp.float32, ch_chunk=128))
    assert out2.shape == (N2, Cout2, H, W), out2.shape
    assert jnp.allclose(out2, ref2, atol=1e-4, rtol=1e-4), \
        float(jnp.max(jnp.abs(out2 - ref2)))

    print("KERNEL_OK")
</pallas_src>

<mosaic_0001>
module attributes {stable_mosaic.version = 11 : i64} {
  func.func @conv_mlp_kernel(%arg0: i32, %arg1: i32, %arg2: memref<1x4x256xf32, #tpu.memory_space<vmem>>, %arg3: memref<32x4xf32, #tpu.memory_space<vmem>>, %arg4: memref<32x1xf32, #tpu.memory_space<vmem>>, %arg5: memref<4x32xf32, #tpu.memory_space<vmem>>, %arg6: memref<4x1xf32, #tpu.memory_space<vmem>>, %arg7: memref<1x4x256xf32, #tpu.memory_space<vmem>>, %arg8: memref<1x4x256xf32, #tpu.memory_space<vmem>>) attributes {dimension_semantics = [#tpu.dimension_semantics<parallel>, #tpu.dimension_semantics<parallel>], iteration_bounds = array<i64: 2, 1>, scalar_prefetch = 0 : i64, scratch_operands = 1 : i64, tpu.core_type = #tpu.core_type<tc>, window_params = [{transform_indices = @transform_0, window_bounds = array<i64: 1, 4, 256>}, {pipeline_mode = #tpu.pipeline_mode<synchronous>, transform_indices = @transform_1, window_bounds = array<i64: 32, 4>}, {pipeline_mode = #tpu.pipeline_mode<synchronous>, transform_indices = @transform_2, window_bounds = array<i64: 32, 1>}, {pipeline_mode = #tpu.pipeline_mode<synchronous>, transform_indices = @transform_3, window_bounds = array<i64: 4, 32>}, {pipeline_mode = #tpu.pipeline_mode<synchronous>, transform_indices = @transform_4, window_bounds = array<i64: 4, 1>}, {transform_indices = @transform_5, window_bounds = array<i64: 1, 4, 256>}]} {
    %c0 = arith.constant 0 : index
    %c0_0 = arith.constant 0 : index
    %0 = vector.load %arg6[%c0, %c0_0] : memref<4x1xf32, #tpu.memory_space<vmem>>, vector<4x1xf32>
    %c0_1 = arith.constant 0 : index
    %c0_2 = arith.constant 0 : index
    %c0_3 = arith.constant 0 : index
    %1 = vector.load %arg2[%c0_1, %c0_2, %c0_3] : memref<1x4x256xf32, #tpu.memory_space<vmem>>, vector<1x4x256xf32>
    %2 = vector.shape_cast %1 : vector<1x4x256xf32> to vector<4x256xf32>
    %c0_4 = arith.constant 0 : index
    %c0_5 = arith.constant 0 : index
    %3 = vector.load %arg3[%c0_4, %c0_5] : memref<32x4xf32, #tpu.memory_space<vmem>>, vector<32x4xf32>
    %cst = arith.constant dense<0.000000e+00> : vector<32x256xf32>
    %4 = tpu.matmul %3, %2, %cst {dimension_numbers = #tpu.dot_dimension_numbers<[1], [0], [0], [1], [0, 0, 1, 1], [], []>} : vector<32x4xf32>, vector<4x256xf32>, vector<32x256xf32> -> vector<32x256xf32>
    %c0_6 = arith.constant 0 : index
    %c0_7 = arith.constant 0 : index
    %5 = vector.load %arg4[%c0_6, %c0_7] : memref<32x1xf32, #tpu.memory_space<vmem>>, vector<32x1xf32>
    %6 = vector.broadcast %5 : vector<32x1xf32> to vector<32x256xf32>
    %7 = arith.addf %4, %6 : vector<32x256xf32>
    %cst_8 = arith.constant 5.000000e-01 : f32
    %8 = vector.broadcast %cst_8 : f32 to vector<32x256xf32>
    %9 = arith.mulf %8, %7 : vector<32x256xf32>
    %cst_9 = arith.constant 0.707106769 : f32
    %10 = vector.broadcast %cst_9 : f32 to vector<32x256xf32>
    %11 = arith.mulf %7, %10 : vector<32x256xf32>
    %12 = math.erf %11 : vector<32x256xf32>
    %cst_10 = arith.constant 1.000000e+00 : f32
    %13 = vector.broadcast %cst_10 : f32 to vector<32x256xf32>
    %14 = arith.addf %13, %12 : vector<32x256xf32>
    %15 = arith.mulf %9, %14 : vector<32x256xf32>
    %c0_11 = arith.constant 0 : index
    %c0_12 = arith.constant 0 : index
    %16 = vector.load %arg5[%c0_11, %c0_12] : memref<4x32xf32, #tpu.memory_space<vmem>>, vector<4x32xf32>
    %cst_13 = arith.constant dense<0.000000e+00> : vector<4x256xf32>
    %17 = tpu.matmul %16, %15, %cst_13 {dimension_numbers = #tpu.dot_dimension_numbers<[1], [0], [0], [1], [0, 0, 1, 1], [], []>} : vector<4x32xf32>, vector<32x256xf32>, vector<4x256xf32> -> vector<4x256xf32>
    %c0_14 = arith.constant 0 : index
    %c0_15 = arith.constant 0 : index
    %c0_16 = arith.constant 0 : index
    %18 = vector.load %arg8[%c0_14, %c0_15, %c0_16] : memref<1x4x256xf32, #tpu.memory_space<vmem>>, vector<1x4x256xf32>
    %19 = vector.shape_cast %18 : vector<1x4x256xf32> to vector<4x256xf32>
    %20 = vector.shape_cast %17 : vector<4x256xf32> to vector<1x4x256xf32>
    tpu.vector_store %arg8[%c0_14, %c0_15, %c0_16], %20 {strides = array<i32>} : memref<1x4x256xf32, #tpu.memory_space<vmem>>, vector<1x4x256xf32>,
    %c0_17 = arith.constant 0 : index
    %c0_18 = arith.constant 0 : index
    %c0_19 = arith.constant 0 : index
    %21 = vector.load %arg8[%c0_17, %c0_18, %c0_19] : memref<1x4x256xf32, #tpu.memory_space<vmem>>, vector<1x4x256xf32>
    %22 = vector.shape_cast %21 : vector<1x4x256xf32> to vector<4x256xf32>
    %23 = vector.broadcast %0 : vector<4x1xf32> to vector<4x256xf32>
    %24 = arith.addf %22, %23 : vector<4x256xf32>
    %c0_20 = arith.constant 0 : index
    %c0_21 = arith.constant 0 : index
    %c0_22 = arith.constant 0 : index
    %25 = vector.load %arg7[%c0_20, %c0_21, %c0_22] : memref<1x4x256xf32, #tpu.memory_space<vmem>>, vector<1x4x256xf32>
    %26 = vector.shape_cast %25 : vector<1x4x256xf32> to vector<4x256xf32>
    %27 = vector.shape_cast %24 : vector<4x256xf32> to vector<1x4x256xf32>
    tpu.vector_store %arg7[%c0_20, %c0_21, %c0_22], %27 {strides = array<i32>} : memref<1x4x256xf32, #tpu.memory_space<vmem>>, vector<1x4x256xf32>,
    return
  }
  func.func @transform_0(%arg0: i32, %arg1: i32) -> (i32, i32, i32) {
    %c0_i32 = arith.constant 0 : i32
    %c0_i32_0 = arith.constant 0 : i32
    return %arg0, %c0_i32, %arg1 : i32, i32, i32
  }
  func.func @transform_1(%arg0: i32, %arg1: i32) -> (i32, i32) {
    %c0_i32 = arith.constant 0 : i32
    %c0_i32_0 = arith.constant 0 : i32
    %c0_i32_1 = arith.constant 0 : i32
    return %c0_i32, %c0_i32_0 : i32, i32
  }
  func.func @transform_2(%arg0: i32, %arg1: i32) -> (i32, i32) {
    %c0_i32 = arith.constant 0 : i32
    %c0_i32_0 = arith.constant 0 : i32
    %c0_i32_1 = arith.constant 0 : i32
    return %c0_i32, %c0_i32_0 : i32, i32
  }
  func.func @transform_3(%arg0: i32, %arg1: i32) -> (i32, i32) {
    %c0_i32 = arith.constant 0 : i32
    %c0_i32_0 = arith.constant 0 : i32
    %c0_i32_1 = arith.constant 0 : i32
    return %c0_i32, %c0_i32_0 : i32, i32
  }
  func.func @transform_4(%arg0: i32, %arg1: i32) -> (i32, i32) {
    %c0_i32 = arith.constant 0 : i32
    %c0_i32_0 = arith.constant 0 : i32
    %c0_i32_1 = arith.constant 0 : i32
    return %c0_i32, %c0_i32_0 : i32, i32
  }
  func.func @transform_5(%arg0: i32, %arg1: i32) -> (i32, i32, i32) {
    %c0_i32 = arith.constant 0 : i32
    %c0_i32_0 = arith.constant 0 : i32
    return %arg0, %c0_i32, %arg1 : i32, i32, i32
  }
}

module attributes {stable_mosaic.version = 11 : i64} {
  func.func @conv_mlp_kernel(%arg0: i32, %arg1: i32, %arg2: memref<1x4x256xf32, #tpu.memory_space<vmem>>, %arg3: memref<32x4xf32, #tpu.memory_space<vmem>>, %arg4: memref<32x1xf32, #tpu.memory_space<vmem>>, %arg5: memref<4x32xf32, #tpu.memory_space<vmem>>, %arg6: memref<4x1xf32, #tpu.memory_space<vmem>>, %arg7: memref<1x4x256xf32, #tpu.memory_space<vmem>>, %arg8: memref<1x4x256xf32, #tpu.memory_space<vmem>>) attributes {dimension_semantics = [#tpu.dimension_semantics<parallel>, #tpu.dimension_semantics<parallel>], iteration_bounds = array<i64: 2, 1>, scalar_prefetch = 0 : i64, scratch_operands = 1 : i64, tpu.core_type = #tpu.core_type<tc>, window_params = [{transform_indices = @transform_0, window_bounds = array<i64: 1, 4, 256>}, {pipeline_mode = #tpu.pipeline_mode<synchronous>, transform_indices = @transform_1, window_bounds = array<i64: 32, 4>}, {pipeline_mode = #tpu.pipeline_mode<synchronous>, transform_indices = @transform_2, window_bounds = array<i64: 32, 1>}, {pipeline_mode = #tpu.pipeline_mode<synchronous>, transform_indices = @transform_3, window_bounds = array<i64: 4, 32>}, {pipeline_mode = #tpu.pipeline_mode<synchronous>, transform_indices = @transform_4, window_bounds = array<i64: 4, 1>}, {transform_indices = @transform_5, window_bounds = array<i64: 1, 4, 256>}]} {
    %c0 = arith.constant 0 : index
    %c0_0 = arith.constant 0 : index
    %0 = vector.load %arg6[%c0, %c0_0] : memref<4x1xf32, #tpu.memory_space<vmem>>, vector<4x1xf32>
    %c0_1 = arith.constant 0 : index
    %c0_2 = arith.constant 0 : index
    %c0_3 = arith.constant 0 : index
    %1 = vector.load %arg2[%c0_1, %c0_2, %c0_3] : memref<1x4x256xf32, #tpu.memory_space<vmem>>, vector<1x4x256xf32>
    %2 = vector.shape_cast %1 : vector<1x4x256xf32> to vector<4x256xf32>
    %c0_4 = arith.constant 0 : index
    %c0_5 = arith.constant 0 : index
    %3 = vector.load %arg3[%c0_4, %c0_5] : memref<32x4xf32, #tpu.memory_space<vmem>>, vector<32x4xf32>
    %cst = arith.constant dense<0.000000e+00> : vector<32x256xf32>
    %4 = tpu.matmul %3, %2, %cst {dimension_numbers = #tpu.dot_dimension_numbers<[1], [0], [0], [1], [0, 0, 1, 1], [], []>} : vector<32x4xf32>, vector<4x256xf32>, vector<32x256xf32> -> vector<32x256xf32>
    %c0_6 = arith.constant 0 : index
    %c0_7 = arith.constant 0 : index
    %5 = vector.load %arg4[%c0_6, %c0_7] : memref<32x1xf32, #tpu.memory_space<vmem>>, vector<32x1xf32>
    %6 = vector.broadcast %5 : vector<32x1xf32> to vector<32x256xf32>
    %7 = arith.addf %4, %6 : vector<32x256xf32>
    %cst_8 = arith.constant 5.000000e-01 : f32
    %8 = vector.broadcast %cst_8 : f32 to vector<32x256xf32>
    %9 = arith.mulf %8, %7 : vector<32x256xf32>
    %cst_9 = arith.constant 0.707106769 : f32
    %10 = vector.broadcast %cst_9 : f32 to vector<32x256xf32>
    %11 = arith.mulf %7, %10 : vector<32x256xf32>
    %12 = math.erf %11 : vector<32x256xf32>
    %cst_10 = arith.constant 1.000000e+00 : f32
    %13 = vector.broadcast %cst_10 : f32 to vector<32x256xf32>
    %14 = arith.addf %13, %12 : vector<32x256xf32>
    %15 = arith.mulf %9, %14 : vector<32x256xf32>
    %c0_11 = arith.constant 0 : index
    %c0_12 = arith.constant 0 : index
    %16 = vector.load %arg5[%c0_11, %c0_12] : memref<4x32xf32, #tpu.memory_space<vmem>>, vector<4x32xf32>
    %cst_13 = arith.constant dense<0.000000e+00> : vector<4x256xf32>
    %17 = tpu.matmul %16, %15, %cst_13 {dimension_numbers = #tpu.dot_dimension_numbers<[1], [0], [0], [1], [0, 0, 1, 1], [], []>} : vector<4x32xf32>, vector<32x256xf32>, vector<4x256xf32> -> vector<4x256xf32>
    %c0_14 = arith.constant 0 : index
    %c0_15 = arith.constant 0 : index
    %c0_16 = arith.constant 0 : index
    %18 = vector.load %arg8[%c0_14, %c0_15, %c0_16] : memref<1x4x256xf32, #tpu.memory_space<vmem>>, vector<1x4x256xf32>
    %19 = vector.shape_cast %18 : vector<1x4x256xf32> to vector<4x256xf32>
    %20 = vector.shape_cast %17 : vector<4x256xf32> to vector<1x4x256xf32>
    tpu.vector_store %arg8[%c0_14, %c0_15, %c0_16], %20 {strides = array<i32>} : memref<1x4x256xf32, #tpu.memory_space<vmem>>, vector<1x4x256xf32>,
    %c0_17 = arith.constant 0 : index
    %c0_18 = arith.constant 0 : index
    %c0_19 = arith.constant 0 : index
    %21 = vector.load %arg8[%c0_17, %c0_18, %c0_19] : memref<1x4x256xf32, #tpu.memory_space<vmem>>, vector<1x4x256xf32>
    %22 = vector.shape_cast %21 : vector<1x4x256xf32> to vector<4x256xf32>
    %23 = vector.broadcast %0 : vector<4x1xf32> to vector<4x256xf32>
    %24 = arith.addf %22, %23 : vector<4x256xf32>
    %c0_20 = arith.constant 0 : index
    %c0_21 = arith.constant 0 : index
    %c0_22 = arith.constant 0 : index
    %25 = vector.load %arg7[%c0_20, %c0_21, %c0_22] : memref<1x4x256xf32, #tpu.memory_space<vmem>>, vector<1x4x256xf32>
    %26 = vector.shape_cast %25 : vector<1x4x256xf32> to vector<4x256xf32>
    %27 = vector.shape_cast %24 : vector<4x256xf32> to vector<1x4x256xf32>
    tpu.vector_store %arg7[%c0_20, %c0_21, %c0_22], %27 {strides = array<i32>} : memref<1x4x256xf32, #tpu.memory_space<vmem>>, vector<1x4x256xf32>,
    return
  }
  func.func @transform_0(%arg0: i32, %arg1: i32) -> (i32, i32, i32) {
    %c0_i32 = arith.constant 0 : i32
    %c0_i32_0 = arith.constant 0 : i32
    return %arg0, %c0_i32, %arg1 : i32, i32, i32
  }
  func.func @transform_1(%arg0: i32, %arg1: i32) -> (i32, i32) {
    %c0_i32 = arith.constant 0 : i32
    %c0_i32_0 = arith.constant 0 : i32
    %c0_i32_1 = arith.constant 0 : i32
    return %c0_i32, %c0_i32_0 : i32, i32
  }
  func.func @transform_2(%arg0: i32, %arg1: i32) -> (i32, i32) {
    %c0_i32 = arith.constant 0 : i32
    %c0_i32_0 = arith.constant 0 : i32
    %c0_i32_1 = arith.constant 0 : i32
    return %c0_i32, %c0_i32_0 : i32, i32
  }
  func.func @transform_3(%arg0: i32, %arg1: i32) -> (i32, i32) {
    %c0_i32 = arith.constant 0 : i32
    %c0_i32_0 = arith.constant 0 : i32
    %c0_i32_1 = arith.constant 0 : i32
    return %c0_i32, %c0_i32_0 : i32, i32
  }
  func.func @transform_4(%arg0: i32, %arg1: i32) -> (i32, i32) {
    %c0_i32 = arith.constant 0 : i32
    %c0_i32_0 = arith.constant 0 : i32
    %c0_i32_1 = arith.constant 0 : i32
    return %c0_i32, %c0_i32_0 : i32, i32
  }
  func.func @transform_5(%arg0: i32, %arg1: i32) -> (i32, i32, i32) {
    %c0_i32 = arith.constant 0 : i32
    %c0_i32_0 = arith.constant 0 : i32
    return %arg0, %c0_i32, %arg1 : i32, i32, i32
  }
}

</mosaic_0001>

<llo_original>
// kernel: tpu_custom_call.1
$region0: #{tpu_custom_call.1}
  #allocation0 [shape = 'u32[]', space=smem, size = 0x4, offset = 0x4, fixed_abs, tag = 'smem constant byte address 0x4 - core index']
  #allocation1 [shape = 'u32[144,128]{1,0:T(1,128)}', space=vmem, size = 0x12000, scoped, tag = 'internal scratch']
  #allocation2 [shape = 'f32[1,4,256]{2,1,0:T(4,128)}', space=vmem, size = 0x1000, scoped, tag = 'scratch operand']
  %s0 = inlined_call_operand.vmem [shape: f32[2,4,256], index: 0, kind: input, shape index: {}]
  %s1 = inlined_call_operand.vmem [shape: f32[32,4], index: 1, kind: input, shape index: {}]
  %s2 = inlined_call_operand.vmem [shape: f32[32,1], index: 2, kind: input, shape index: {}]
  %s3 = inlined_call_operand.vmem [shape: f32[4,32], index: 3, kind: input, shape index: {}]
  %s4 = inlined_call_operand.vmem [shape: f32[4,1], index: 4, kind: input, shape index: {}]
  %s5 = inlined_call_operand.hbm [shape: f32[2,4,256], index: 5, kind: output, shape index: {}]
  %s6 = sld [smem:[#allocation0]]
  $region53: #{tpu_custom_call.1} parent=0
    _
  %s8 = ssub.s32 1, %s6
  %s9 = scalar_select 0, %s8, %s6
  $region1: #{tpu_custom_call.1} parent=0
    #allocation3 [shape = 'u8[8192]{0}', space=vmem, size = 0x2000, scoped, tag = 'output window, operand 0']
    #allocation4 [shape = 's32[2]{0}', space=sflag, size = 0x8, scoped, tag = 'scoped memory for tpu_custom_call.1']
    %10 = vsyncpa [#allocation4], 0
    %s11 = scalar_lea.sflag [#allocation4], 1
    %12 = vsyncpa %s11, 0
    loop: start=0, step=1, limit=4
    $region2: #{tpu_custom_call.1} parent=1 // loop_pre_header
      _
    $region3: #{tpu_custom_call.1} parent=1 // loop_header
      %s14 = sphi 0, %s18
      %p15 = scmp.ge.s32.totalorder %s14, 4
      %s21 = sphi 0, %s33
      %s22 = sphi 0, %s29
      %s23 = sphi 0, %s21
      %s24 = sphi 0, %s22
      %s25 = sphi 0, %s23
      %s26 = sphi 0, %s24
      %s38 = sphi 0, %s40
      %s41 = sphi 0, %s38
      %s42 = sphi 0, %s41
      %s58 = sphi 0, %s42
      %s62 = sphi 0, %s62
      %s64 = sphi 0, %s62
      %s65 = sphi 0, %s64
      %s79 = sphi 0, %s65
      %s83 = sphi 0, %s83
      %s85 = sphi 0, %s83
      %s86 = sphi 0, %s85
      %s100 = sphi 0, %s86
      %s104 = sphi 0, %s104
      %s106 = sphi 0, %s104
      %s107 = sphi 0, %s106
      %s121 = sphi 0, %s107
      %s125 = sphi 0, %s125
      %s127 = sphi 0, %s125
      %s128 = sphi 0, %s127
      %s142 = sphi 0, %s128
      %s150 = sphi 0, %s152
      %s153 = sphi 0, %s150
      %s154 = sphi 0, %s153
      %s170 = sphi 0, %s154
    $region4: #{tpu_custom_call.1} parent=1 // loop_header_branch
      %17 = sbr.rel (%p15) target = $region8
    $region5: #{tpu_custom_call.1} parent=1 // loop_body
      %s19 = ssub.s32 %s14, 1
      %s20 = ssub.s32 %s14, 2
      %s27 = sadd.s32 1, %s22
      %p28 = scmp.ge.s32.totalorder %s27, 1
      %s29 = scalar_select %p28, 0, %s27
      %s30 = sadd.s32 1, %s21
      %s31 = scalar_select %p28, %s30, %s21
      %p32 = scmp.ge.s32.totalorder %s31, 2
      %s33 = scalar_select %p32, 0, %s31
      %s34 = ssub.s32 %s21, %s33
      %s35 = ssub.s32 %s22, %s29
      %s36 = sor.u32 %s34, %s35
      %p37 = scmp.eq.s32.totalorder %s36, 0
      %s39 = sadd.s32 %s38, 1
      %s40 = scalar_select %p37, %s38, %s39
      %p43 = pneg %p37
      %p44 = scmp.eq.s32.totalorder %s14, 1
      %p45 = por %p43, %p44
      %p46 = scmp.ne.s32.totalorder %s38, %s41
      %p47 = scmp.eq.s32.totalorder %s14, 0
      %p48 = por %p46, %p47
      %p49 = scmp.ne.s32.totalorder %s38, %s41
      %p50 = scmp.eq.s32.totalorder %s19, 1
      %p51 = por %p49, %p50
      %p52 = scmp.ne.s32.totalorder %s41, %s42
      %p53 = scmp.eq.s32.totalorder %s19, 0
      %p54 = por %p52, %p53
      %p55 = scmp.ne.s32.totalorder %s41, %s42
      %p56 = scmp.eq.s32.totalorder %s20, 1
      %p57 = por %p55, %p56
      %p59 = scmp.ne.s32.totalorder %s42, %s58
      %p60 = scmp.eq.s32.totalorder %s20, 0
      %p61 = por %p59, %p60
      %s63 = sadd.s32 %s62, 1
      %p66 = scmp.eq.s32.totalorder %s14, 1
      %p67 = scmp.ne.s32.totalorder %s62, %s64
      %p68 = scmp.eq.s32.totalorder %s14, 0
      %p69 = por %p67, %p68
      %p70 = scmp.ne.s32.totalorder %s62, %s64
      %p71 = scmp.eq.s32.totalorder %s19, 1
      %p72 = por %p70, %p71
      %p73 = scmp.ne.s32.totalorder %s64, %s65
      %p74 = scmp.eq.s32.totalorder %s19, 0
      %p75 = por %p73, %p74
      %p76 = scmp.ne.s32.totalorder %s64, %s65
      %p77 = scmp.eq.s32.totalorder %s20, 1
      %p78 = por %p76, %p77
      %p80 = scmp.ne.s32.totalorder %s65, %s79
      %p81 = scmp.eq.s32.totalorder %s20, 0
      %p82 = por %p80, %p81
      %s84 = sadd.s32 %s83, 1
      %p87 = scmp.eq.s32.totalorder %s14, 1
      %p88 = scmp.ne.s32.totalorder %s83, %s85
      %p89 = scmp.eq.s32.totalorder %s14, 0
      %p90 = por %p88, %p89
      %p91 = scmp.ne.s32.totalorder %s83, %s85
      %p92 = scmp.eq.s32.totalorder %s19, 1
      %p93 = por %p91, %p92
      %p94 = scmp.ne.s32.totalorder %s85, %s86
      %p95 = scmp.eq.s32.totalorder %s19, 0
      %p96 = por %p94, %p95
      %p97 = scmp.ne.s32.totalorder %s85, %s86
      %p98 = scmp.eq.s32.totalorder %s20, 1
      %p99 = por %p97, %p98
      %p101 = scmp.ne.s32.totalorder %s86, %s100
      %p102 = scmp.eq.s32.totalorder %s20, 0
      %p103 = por %p101, %p102
      %s105 = sadd.s32 %s104, 1
      %p108 = scmp.eq.s32.totalorder %s14, 1
      %p109 = scmp.ne.s32.totalorder %s104, %s106
      %p110 = scmp.eq.s32.totalorder %s14, 0
      %p111 = por %p109, %p110
      %p112 = scmp.ne.s32.totalorder %s104, %s106
      %p113 = scmp.eq.s32.totalorder %s19, 1
      %p114 = por %p112, %p113
      %p115 = scmp.ne.s32.totalorder %s106, %s107
      %p116 = scmp.eq.s32.totalorder %s19, 0
      %p117 = por %p115, %p116
      %p118 = scmp.ne.s32.totalorder %s106, %s107
      %p119 = scmp.eq.s32.totalorder %s20, 1
      %p120 = por %p118, %p119
      %p122 = scmp.ne.s32.totalorder %s107, %s121
      %p123 = scmp.eq.s32.totalorder %s20, 0
      %p124 = por %p122, %p123
      %s126 = sadd.s32 %s125, 1
      %p129 = scmp.eq.s32.totalorder %s14, 1
      %p130 = scmp.ne.s32.totalorder %s125, %s127
      %p131 = scmp.eq.s32.totalorder %s14, 0
      %p132 = por %p130, %p131
      %p133 = scmp.ne.s32.totalorder %s125, %s127
      %p134 = scmp.eq.s32.totalorder %s19, 1
      %p135 = por %p133, %p134
      %p136 = scmp.ne.s32.totalorder %s127, %s128
      %p137 = scmp.eq.s32.totalorder %s19, 0
      %p138 = por %p136, %p137
      %p139 = scmp.ne.s32.totalorder %s127, %s128
      %p140 = scmp.eq.s32.totalorder %s20, 1
      %p141 = por %p139, %p140
      %p143 = scmp.ne.s32.totalorder %s128, %s142
      %p144 = scmp.eq.s32.totalorder %s20, 0
      %p145 = por %p143, %p144
      %s146 = ssub.s32 %s21, %s33
      %s147 = ssub.s32 %s22, %s29
      %s148 = sor.u32 %s146, %s147
      %p149 = scmp.eq.s32.totalorder %s148, 0
      %s151 = sadd.s32 %s150, 1
      %s152 = scalar_select %p149, %s150, %s151
      %p155 = pneg %p149
      %p156 = scmp.eq.s32.totalorder %s14, 1
      %p157 = por %p155, %p156
      %p158 = scmp.ne.s32.totalorder %s150, %s153
      %p159 = scmp.eq.s32.totalorder %s14, 0
      %p160 = por %p158, %p159
      %p161 = scmp.ne.s32.totalorder %s150, %s153
      %p162 = scmp.eq.s32.totalorder %s19, 1
      %p163 = por %p161, %p162
      %p164 = scmp.ne.s32.totalorder %s153, %s154
      %p165 = scmp.eq.s32.totalorder %s19, 0
      %p166 = por %p164, %p165
      %p167 = scmp.ne.s32.totalorder %s153, %s154
      %p168 = scmp.eq.s32.totalorder %s20, 1
      %p169 = por %p167, %p168
      %p171 = scmp.ne.s32.totalorder %s154, %s170
      %p172 = scmp.eq.s32.totalorder %s20, 0
      %p173 = por %p171, %p172
      %p174 = scmp.le.s32.totalorder 1, %s14
      %p175 = scmp.lt.s32.totalorder %s14, 3
      %p176 = pnand %p174, %p175
      %p177 = pneg %p176
      // Predicated region
      $region9: #{tpu_custom_call.1} parent=5 // pred_check
        _
      $region10: #{tpu_custom_call.1} parent=5 // pred_check_branch
        %179 = sbr.rel (%p176) target = $region12
      $region11: #{tpu_custom_call.1} parent=5 // pred_region
        %s180 = ssub.s32 %s14, 1
        // Predicated region
        $region13: #{tpu_custom_call.1} parent=11 // pred_check
          %p181 = pneg %p75
        $region14: #{tpu_custom_call.1} parent=11 // pred_check_branch
          %183 = sbr.rel (%p181) target = $region16
        $region15: #{tpu_custom_call.1} parent=11 // pred_region
          _
        $region16: #{tpu_custom_call.1} parent=11 // pred_fallthru
          _
        // Predicated region
        $region17: #{tpu_custom_call.1} parent=11 // pred_check
          %p184 = pneg %p96
        $region18: #{tpu_custom_call.1} parent=11 // pred_check_branch
          %186 = sbr.rel (%p184) target = $region20
        $region19: #{tpu_custom_call.1} parent=11 // pred_region
          _
        $region20: #{tpu_custom_call.1} parent=11 // pred_fallthru
          _
        // Predicated region
        $region21: #{tpu_custom_call.1} parent=11 // pred_check
          %p187 = pneg %p117
        $region22: #{tpu_custom_call.1} parent=11 // pred_check_branch
          %189 = sbr.rel (%p187) target = $region24
        $region23: #{tpu_custom_call.1} parent=11 // pred_region
          _
        $region24: #{tpu_custom_call.1} parent=11 // pred_fallthru
          _
        // Predicated region
        $region25: #{tpu_custom_call.1} parent=11 // pred_check
          %p190 = pneg %p138
        $region26: #{tpu_custom_call.1} parent=11 // pred_check_branch
          %192 = sbr.rel (%p190) target = $region28
        $region27: #{tpu_custom_call.1} parent=11 // pred_region
          _
        $region28: #{tpu_custom_call.1} parent=11 // pred_fallthru
          _
      $region12: #{tpu_custom_call.1} parent=5 // pred_fallthru
        _
      %p193 = scmp.lt.s32.totalorder %s14, 2
      // Predicated region
      $region29: #{tpu_custom_call.1} parent=5 // pred_check
        %p194 = pneg %p193
      $region30: #{tpu_custom_call.1} parent=5 // pred_check_branch
        %196 = sbr.rel (%p194) target = $region32
      $region31: #{tpu_custom_call.1} parent=5 // pred_region
        // Predicated region
        $region33: #{tpu_custom_call.1} parent=31 // pred_check
          %p197 = pneg %p48
        $region34: #{tpu_custom_call.1} parent=31 // pred_check_branch
          %199 = sbr.rel (%p197) target = $region36
        $region35: #{tpu_custom_call.1} parent=31 // pred_region
          %s200 = smul.u32 2, %s22
          %p201 = scmp.lt.s32.totalorder %s21, 1
          %s202 = scalar_select %p201, %s21, 1
          %p203 = scmp.lt.s32.totalorder %s200, 1
          %s204 = scalar_select %p203, %s200, 1
          %s205 = smul.addr %s202, 2
          %s206 = sadd.s32 %s204, %s205
          %s207 = smul.addr %s206, 4
          %s208 = scalar_lea.vmem %s0, %s207
          %s209 = smul.u32 2, %s22
        $region36: #{tpu_custom_call.1} parent=31 // pred_fallthru
          _
      $region32: #{tpu_custom_call.1} parent=5 // pred_fallthru
        _
      %p210 = scmp.le.s32.totalorder 1, %s14
      %p211 = scmp.lt.s32.totalorder %s14, 3
      %p212 = pnand %p210, %p211
      %p213 = pneg %p212
      // Predicated region
      $region37: #{tpu_custom_call.1} parent=5 // pred_check
        _
      $region38: #{tpu_custom_call.1} parent=5 // pred_check_branch
        %215 = sbr.rel (%p212) target = $region40
      $region39: #{tpu_custom_call.1} parent=5 // pred_region
        %s216 = ssub.s32 %s14, 1
        %s217 = smul.u32 2, %s24
        %p218 = scmp.lt.s32.totalorder %s23, 1
        %s219 = scalar_select %p218, %s23, 1
        %p220 = scmp.lt.s32.totalorder %s217, 1
        %s221 = scalar_select %p220, %s217, 1
        %s222 = smul.addr %s219, 2
        %s223 = sadd.s32 %s221, %s222
        %s224 = smul.addr %s223, 4
        %s225 = scalar_lea.vmem %s0, %s224
        %p226 = pneg %p54
        %p227 = pneg %p51
        %p228 = pneg %p75
        %p229 = pneg %p72
        %p230 = pneg %p96
        %p231 = pneg %p93
        %p232 = pneg %p117
        %p233 = pneg %p114
        %p234 = pneg %p138
        %p235 = pneg %p135
        %p236 = pneg %p166
        %p237 = pneg %p163
        %s238 = sand.u32 %s153, 1
        %s239 = scalar_lea.sflag [#allocation4], %s238
        %s240 = sand.u32 %s153, 1
        %s241 = smul.addr %s240, 8
        %s242 = scalar_lea.vmem [#allocation3], %s241
        %s243 = smul.u32 2, %s24
        %p244 = scmp.lt.s32.totalorder %s23, 1
        %s245 = scalar_select %p244, %s23, 1
        %p246 = scmp.lt.s32.totalorder %s243, 1
        %s247 = scalar_select %p246, %s243, 1
        %s248 = smul.addr %s245, 2
        %s249 = sadd.s32 %s247, %s248
        %s250 = smul.addr %s249, 4
        %s251 = scalar_lea.vmem %s0, %s250
        %s252 = smul.u32 2, %s24
        %s253 = smul.u32 2, %s24
        %v254 = vld [vmem:[%s4] sm:$0xf]
        %v255 = vld [vmem:[%s251] sm:$0xff]
        %v256 = vld [vmem:[%s1] sm:$0xff]
        %v257 = vld [vmem:[%s1 + $0x8] sm:$0xff]
        %v258 = vld [vmem:[%s1 + $0x10] sm:$0xff]
        %v259 = vld [vmem:[%s1 + $0x18] sm:$0xff]
        %v260 = vld [vmem:[%s2] sm:$0xff]
        %v261 = vld [vmem:[%s2 + $0x8] sm:$0xff]
        %v262 = vld [vmem:[%s2 + $0x10] sm:$0xff]
        %v263 = vld [vmem:[%s2 + $0x18] sm:$0xff]
        %265 = vset.pattern.permute.xlu0 0
        %266 = vperm.xlu0 %265, %v260
        %v267 = vpop.permute.xlu0 %266
        %270 = vset.pattern.permute.xlu0 0
        %271 = vperm.xlu0 %270, %v261
        %v272 = vpop.permute.xlu0 %271
        %275 = vset.pattern.permute.xlu0 0
        %276 = vperm.xlu0 %275, %v262
        %v277 = vpop.permute.xlu0 %276
        %280 = vset.pattern.permute.xlu0 0
        %281 = vperm.xlu0 %280, %v263
        %v282 = vpop.permute.xlu0 %281
        %v285 = vcombine.high %v255, %v255
        %vm286 = vcmask 31744
        %v288 = vsel %vm286, %v256, 0
        %v291 = vsel %vm286, %v257, 0
        %v294 = vsel %vm286, %v258, 0
        %v297 = vsel %vm286, %v259, 0
        %vm299 = vcmask 1043456
        %v300 = vsel %vm299, %v255, 0
        %v302 = vsel %vm299, %v285, 0
        %304 = vmatprep.subr.mxu0 %v302
        %305 = vmatpush1.msra.mxu0 %v300
        %306 = vmatprep.subr.mxu0 0.0
        %307 = vmatpush1.msra.mxu0 0.0
        %308 = vmatprep.subr.mxu0 0.0
        %309 = vmatpush1.msra.mxu0 0.0
        %310 = vmatprep.subr.mxu0 0.0
        %311 = vmatpush1.msra.mxu0 0.0
        %312 = vmatprep.subr.mxu0 0.0
        %313 = vmatpush1.msra.mxu0 0.0
        %314 = vmatprep.subr.mxu0 0.0
        %315 = vmatpush1.msra.mxu0 0.0
        %316 = vmatprep.subr.mxu0 0.0
        %317 = vmatpush1.msra.mxu0 0.0
        %318 = vmatprep.subr.mxu0 0.0
        %319 = vmatpush1.msra.mxu0 0.0
        %320 = vmatprep.subr.mxu0 0.0
        %321 = vmatpush1.msra.mxu0 0.0
        %322 = vmatprep.subr.mxu0 0.0
        %323 = vmatpush1.msra.mxu0 0.0
        %324 = vmatprep.subr.mxu0 0.0
        %325 = vmatpush1.msra.mxu0 0.0
        %326 = vmatprep.subr.mxu0 0.0
        %327 = vmatpush1.msra.mxu0 0.0
        %328 = vmatprep.subr.mxu0 0.0
        %329 = vmatpush1.msra.mxu0 0.0
        %330 = vmatprep.subr.mxu0 0.0
        %331 = vmatpush1.msra.mxu0 0.0
        %332 = vmatprep.subr.mxu0 0.0
        %333 = vmatpush1.msra.mxu0 0.0
        %334 = vmatprep.subr.mxu0 0.0
        %335 = vmatpush1.msra.mxu0 0.0
        %336 = vmatprep.subr.mxu0 0.0
        %337 = vmatpush1.msra.mxu0 0.0
        %338 = vmatprep.subr.mxu0 0.0
        %339 = vmatpush1.msra.mxu0 0.0
        %340 = vmatprep.subr.mxu0 0.0
        %341 = vmatpush1.msra.mxu0 0.0
        %342 = vmatprep.subr.mxu0 0.0
        %343 = vmatpush1.msra.mxu0 0.0
        %344 = vmatprep.subr.mxu0 0.0
        %345 = vmatpush1.msra.mxu0 0.0
        %346 = vmatprep.subr.mxu0 0.0
        %347 = vmatpush1.msra.mxu0 0.0
        %348 = vmatprep.subr.mxu0 0.0
        %349 = vmatpush1.msra.mxu0 0.0
        %350 = vmatprep.subr.mxu0 0.0
        %351 = vmatpush1.msra.mxu0 0.0
        %352 = vmatprep.subr.mxu0 0.0
        %353 = vmatpush1.msra.mxu0 0.0
        %354 = vmatprep.subr.mxu0 0.0
        %355 = vmatpush1.msra.mxu0 0.0
        %356 = vmatprep.subr.mxu0 0.0
        %357 = vmatpush1.msra.mxu0 0.0
        %358 = vmatprep.subr.mxu0 0.0
        %359 = vmatpush1.msra.mxu0 0.0
        %360 = vmatprep.subr.mxu0 0.0
        %361 = vmatpush1.msra.mxu0 0.0
        %362 = vmatprep.subr.mxu0 0.0
        %363 = vmatpush1.msra.mxu0 0.0
        %364 = vmatprep.subr.mxu0 0.0
        %365 = vmatpush1.msra.mxu0 0.0
        %366 = vmatprep.subr.mxu0 0.0
        %367 = vmatpush1.msra.mxu0 0.0
        %368 = vmatprep.mubr.f32.mxu0 0.0
        %369 = vmatmul.mubr.f32.gmra.mrb[0].mxu0 %v288
        %v370 = vpop.f32.mrb[0].mxu0
        %v371 = vadd.f32 %v267, %v370
        %v372 = vpop.f32.mrb[0].mxu0
        %v373 = vadd.f32 %v267, %v372
        %374 = vmatprep.mubr.f32.mxu0 0.0
        %375 = vmatmul.mubr.f32.gmra.mrb[0].mxu0 %v291
        %v376 = vpop.f32.mrb[0].mxu0
        %v377 = vadd.f32 %v272, %v376
        %v378 = vpop.f32.mrb[0].mxu0
        %v379 = vadd.f32 %v272, %v378
        %380 = vmatprep.mubr.f32.mxu0 0.0
        %381 = vmatmul.mubr.f32.gmra.mrb[0].mxu0 %v294
        %v382 = vpop.f32.mrb[0].mxu0
        %v383 = vadd.f32 %v277, %v382
        %v384 = vpop.f32.mrb[0].mxu0
        %v385 = vadd.f32 %v277, %v384
        %386 = vmatprep.mubr.f32.mxu0 0.0
        %387 = vmatmul.mubr.f32.gmra.mrb[0].mxu0 %v297
        %v388 = vpop.f32.mrb[0].mxu0
        %v389 = vadd.f32 %v282, %v388
        %v390 = vpop.f32.mrb[0].mxu0
        %v391 = vadd.f32 %v282, %v390
        %392 = vdwg.mxu0
        %v393 = vmul.f32 %v371, 0.5
        %v394 = vmul.f32 %v373, 0.5
        %v395 = vmul.f32 %v377, 0.5
        %v396 = vmul.f32 %v379, 0.5
        %v397 = vmul.f32 %v383, 0.5
        %v398 = vmul.f32 %v385, 0.5
        %v399 = vmul.f32 %v389, 0.5
        %v400 = vmul.f32 %v391, 0.5
        %v401 = vmul.f32 %v371, 0.70710677
        %v402 = vmul.f32 %v373, 0.70710677
        %v403 = vmul.f32 %v377, 0.70710677
        %v404 = vmul.f32 %v379, 0.70710677
        %v405 = vmul.f32 %v383, 0.70710677
        %v406 = vmul.f32 %v385, 0.70710677
        %v407 = vmul.f32 %v389, 0.70710677
        %v408 = vmul.f32 %v391, 0.70710677
        %v409 = verf.f32.pop %v401
        %v410 = verf.f32.pop %v402
        %v411 = verf.f32.pop %v403
        %v412 = verf.f32.pop %v404
        %v413 = verf.f32.pop %v405
        %v414 = verf.f32.pop %v406
        %v415 = verf.f32.pop %v407
        %v416 = verf.f32.pop %v408
        %v417 = vadd.f32 %v409, 1.0
        %v418 = vadd.f32 %v410, 1.0
        %v419 = vadd.f32 %v411, 1.0
        %v420 = vadd.f32 %v412, 1.0
        %v421 = vadd.f32 %v413, 1.0
        %v422 = vadd.f32 %v414, 1.0
        %v423 = vadd.f32 %v415, 1.0
        %v424 = vadd.f32 %v416, 1.0
        %v425 = vmul.f32 %v393, %v417
        %v426 = vmul.f32 %v394, %v418
        %v427 = vmul.f32 %v395, %v419
        %v428 = vmul.f32 %v396, %v420
        %v429 = vmul.f32 %v397, %v421
        %v430 = vmul.f32 %v398, %v422
        %v431 = vmul.f32 %v399, %v423
        %v432 = vmul.f32 %v400, %v424
        %v433 = vld [vmem:[%s3] sm:$0xf]
        %vm434 = vcmask 261120
        %v436 = vsel %vm434, %v433, 0
        %438 = vmatprep.subr.mxu0 %v426
        %439 = vmatpush1.msra.mxu0 %v425
        %440 = vmatprep.subr.mxu0 %v428
        %441 = vmatpush1.msra.mxu0 %v427
        %442 = vmatprep.subr.mxu0 %v430
        %443 = vmatpush1.msra.mxu0 %v429
        %444 = vmatprep.subr.mxu0 %v432
        %445 = vmatpush1.msra.mxu0 %v431
        %446 = vmatprep.subr.mxu0 0.0
        %447 = vmatpush1.msra.mxu0 0.0
        %448 = vmatprep.subr.mxu0 0.0
        %449 = vmatpush1.msra.mxu0 0.0
        %450 = vmatprep.subr.mxu0 0.0
        %451 = vmatpush1.msra.mxu0 0.0
        %452 = vmatprep.subr.mxu0 0.0
        %453 = vmatpush1.msra.mxu0 0.0
        %454 = vmatprep.subr.mxu0 0.0
        %455 = vmatpush1.msra.mxu0 0.0
        %456 = vmatprep.subr.mxu0 0.0
        %457 = vmatpush1.msra.mxu0 0.0
        %458 = vmatprep.subr.mxu0 0.0
        %459 = vmatpush1.msra.mxu0 0.0
        %460 = vmatprep.subr.mxu0 0.0
        %461 = vmatpush1.msra.mxu0 0.0
        %462 = vmatprep.subr.mxu0 0.0
        %463 = vmatpush1.msra.mxu0 0.0
        %464 = vmatprep.subr.mxu0 0.0
        %465 = vmatpush1.msra.mxu0 0.0
        %466 = vmatprep.subr.mxu0 0.0
        %467 = vmatpush1.msra.mxu0 0.0
        %468 = vmatprep.subr.mxu0 0.0
        %469 = vmatpush1.msra.mxu0 0.0
        %470 = vmatprep.subr.mxu0 0.0
        %471 = vmatpush1.msra.mxu0 0.0
        %472 = vmatprep.subr.mxu0 0.0
        %473 = vmatpush1.msra.mxu0 0.0
        %474 = vmatprep.subr.mxu0 0.0
        %475 = vmatpush1.msra.mxu0 0.0
        %476 = vmatprep.subr.mxu0 0.0
        %477 = vmatpush1.msra.mxu0 0.0
        %478 = vmatprep.subr.mxu0 0.0
        %479 = vmatpush1.msra.mxu0 0.0
        %480 = vmatprep.subr.mxu0 0.0
        %481 = vmatpush1.msra.mxu0 0.0
        %482 = vmatprep.subr.mxu0 0.0
        %483 = vmatpush1.msra.mxu0 0.0
        %484 = vmatprep.subr.mxu0 0.0
        %485 = vmatpush1.msra.mxu0 0.0
        %486 = vmatprep.subr.mxu0 0.0
        %487 = vmatpush1.msra.mxu0 0.0
        %488 = vmatprep.subr.mxu0 0.0
        %489 = vmatpush1.msra.mxu0 0.0
        %490 = vmatprep.subr.mxu0 0.0
        %491 = vmatpush1.msra.mxu0 0.0
        %492 = vmatprep.subr.mxu0 0.0
        %493 = vmatpush1.msra.mxu0 0.0
        %494 = vmatprep.subr.mxu0 0.0
        %495 = vmatpush1.msra.mxu0 0.0
        %496 = vmatprep.subr.mxu0 0.0
        %497 = vmatpush1.msra.mxu0 0.0
        %498 = vmatprep.subr.mxu0 0.0
        %499 = vmatpush1.msra.mxu0 0.0
        %500 = vmatprep.subr.mxu0 0.0
        %501 = vmatpush1.msra.mxu0 0.0
        %502 = vmatprep.mubr.f32.mxu0 0.0
        %503 = vmatmul.mubr.f32.gmra.mrb[0].mxu0 %v436
        %v504 = vpop.f32.mrb[0].mxu0
        %v505 = vadd.f32 0.0, %v504
        %v506 = vpop.f32.mrb[0].mxu0
        %v507 = vadd.f32 0.0, %v506
        %508 = vdwg.mxu0
        %v511 = vcombine.low %v505, %v507
        %513 = vst [vmem:[#allocation2] sm:$0xff] %v511
        %v514 = vld [vmem:[#allocation2] sm:$0xff]
        %516 = vset.pattern.permute.xlu0 0
        %517 = vperm.xlu0 %516, %v254
        %v518 = vpop.permute.xlu0 %517
        %v520 = vunpack.c.l.s4 839922192
        %v521 = vunpack.c.0.s8 %v520
        %v522 = vlaneseq
        %v523 = vshrl.u32 %v522, 7
        %v524 = vsub.s32 %v521, %v523
        %v525 = vrot.slane %v518, %v524
        %v527 = vadd.f32 %v514, %v525
        %528 = vst [vmem:[%s242] sm:$0xff] %v527
        %s529 = sand.u32 %s153, 1
        %s530 = scalar_lea.sflag [#allocation4], %s529
        %s531 = sand.u32 %s153, 1
        %s532 = smul.addr %s531, 8
        %s533 = scalar_lea.vmem [#allocation3], %s532
        // Predicated region
        $region41: #{tpu_custom_call.1} parent=39 // pred_check
          %p534 = pneg %p163
        $region42: #{tpu_custom_call.1} parent=39 // pred_check_branch
          %536 = sbr.rel (%p534) target = $region44
        $region43: #{tpu_custom_call.1} parent=39 // pred_region
          %s537 = smul.u32 2, %s24
          %s539 = ssub.s32 128, 128
          %540 = vsyncadd %s530, %s539
          %s541 = smul.addr %s23, 2
          %s542 = sadd.s32 %s537, %s541
          %s543 = smul.addr %s542, 64
          %s544 = scalar_lea.hbm %s5, %s543
          %s546 = sshll.u32 %s533, 4
          %s547 = int_to_ptr.vmem [resolvable:$true] %s546
          %549 = dma.vmem_to_hbm [thread:$0]  %s547, 128, %s544, %s530
        $region44: #{tpu_custom_call.1} parent=39 // pred_fallthru
          _
      $region40: #{tpu_custom_call.1} parent=5 // pred_fallthru
        _
      %p550 = scmp.le.s32.totalorder 2, %s14
      // Predicated region
      $region45: #{tpu_custom_call.1} parent=5 // pred_check
        %p551 = pneg %p550
      $region46: #{tpu_custom_call.1} parent=5 // pred_check_branch
        %553 = sbr.rel (%p551) target = $region48
      $region47: #{tpu_custom_call.1} parent=5 // pred_region
        %s554 = ssub.s32 %s14, 2
        // Predicated region
        $region49: #{tpu_custom_call.1} parent=47 // pred_check
          %p555 = pneg %p169
        $region50: #{tpu_custom_call.1} parent=47 // pred_check_branch
          %557 = sbr.rel (%p555) target = $region52
        $region51: #{tpu_custom_call.1} parent=47 // pred_region
          %s558 = sand.u32 %s154, 1
          %s559 = scalar_lea.sflag [#allocation4], %s558
          %s560 = sand.u32 %s154, 1
          %s561 = smul.addr %s560, 8
          %s562 = scalar_lea.vmem [#allocation3], %s561
          %563 = dma.done %s559, 128
        $region52: #{tpu_custom_call.1} parent=47 // pred_fallthru
          _
      $region48: #{tpu_custom_call.1} parent=5 // pred_fallthru
        _
    $region6: #{tpu_custom_call.1} parent=1 // loop_footer
      %s18 = sadd.s32 1, %s14
    $region7: #{tpu_custom_call.1} parent=1 // loop_footer_branch
      %13 = sbr.rel target = $region3
    $region8: #{tpu_custom_call.1} parent=1 // loop_exit
      _
    %564 = vsyncpa [#allocation4], 1
    %s565 = scalar_lea.sflag [#allocation4], 1
    %566 = vsyncpa %s565, 1

// kernel: tpu_custom_call.1
$region0: #{tpu_custom_call.1}
  #allocation0 [shape = 'u32[]', space=smem, size = 0x4, offset = 0x4, fixed_abs, tag = 'smem constant byte address 0x4 - core index']
  #allocation1 [shape = 'u32[144,128]{1,0:T(1,128)}', space=vmem, size = 0x12000, scoped, tag = 'internal scratch']
  #allocation2 [shape = 'f32[1,4,256]{2,1,0:T(4,128)}', space=vmem, size = 0x1000, scoped, tag = 'scratch operand']
  %s0 = inlined_call_operand.vmem [shape: f32[2,4,256], index: 0, kind: input, shape index: {}]
  %s1 = inlined_call_operand.vmem [shape: f32[32,4], index: 1, kind: input, shape index: {}]
  %s2 = inlined_call_operand.vmem [shape: f32[32,1], index: 2, kind: input, shape index: {}]
  %s3 = inlined_call_operand.vmem [shape: f32[4,32], index: 3, kind: input, shape index: {}]
  %s4 = inlined_call_operand.vmem [shape: f32[4,1], index: 4, kind: input, shape index: {}]
  %s5 = inlined_call_operand.hbm [shape: f32[2,4,256], index: 5, kind: output, shape index: {}]
  %s6 = sld [smem:[#allocation0]]
  $region53: #{tpu_custom_call.1} parent=0
    _
  %s8 = ssub.s32 1, %s6
  %s9 = scalar_select 0, %s8, %s6
  $region1: #{tpu_custom_call.1} parent=0
    #allocation3 [shape = 'u8[8192]{0}', space=vmem, size = 0x2000, scoped, tag = 'output window, operand 0']
    #allocation4 [shape = 's32[2]{0}', space=sflag, size = 0x8, scoped, tag = 'scoped memory for tpu_custom_call.1']
    %10 = vsyncpa [#allocation4], 0
    %s11 = scalar_lea.sflag [#allocation4], 1
    %12 = vsyncpa %s11, 0
    loop: start=0, step=1, limit=4
    $region2: #{tpu_custom_call.1} parent=1 // loop_pre_header
      _
    $region3: #{tpu_custom_call.1} parent=1 // loop_header
      %s14 = sphi 0, %s18
      %p15 = scmp.ge.s32.totalorder %s14, 4
      %s21 = sphi 0, %s33
      %s22 = sphi 0, %s29
      %s23 = sphi 0, %s21
      %s24 = sphi 0, %s22
      %s25 = sphi 0, %s23
      %s26 = sphi 0, %s24
      %s38 = sphi 0, %s40
      %s41 = sphi 0, %s38
      %s42 = sphi 0, %s41
      %s58 = sphi 0, %s42
      %s62 = sphi 0, %s62
      %s64 = sphi 0, %s62
      %s65 = sphi 0, %s64
      %s79 = sphi 0, %s65
      %s83 = sphi 0, %s83
      %s85 = sphi 0, %s83
      %s86 = sphi 0, %s85
      %s100 = sphi 0, %s86
      %s104 = sphi 0, %s104
      %s106 = sphi 0, %s104
      %s107 = sphi 0, %s106
      %s121 = sphi 0, %s107
      %s125 = sphi 0, %s125
      %s127 = sphi 0, %s125
      %s128 = sphi 0, %s127
      %s142 = sphi 0, %s128
      %s150 = sphi 0, %s152
      %s153 = sphi 0, %s150
      %s154 = sphi 0, %s153
      %s170 = sphi 0, %s154
    $region4: #{tpu_custom_call.1} parent=1 // loop_header_branch
      %17 = sbr.rel (%p15) target = $region8
    $region5: #{tpu_custom_call.1} parent=1 // loop_body
      %s19 = ssub.s32 %s14, 1
      %s20 = ssub.s32 %s14, 2
      %s27 = sadd.s32 1, %s22
      %p28 = scmp.ge.s32.totalorder %s27, 1
      %s29 = scalar_select %p28, 0, %s27
      %s30 = sadd.s32 1, %s21
      %s31 = scalar_select %p28, %s30, %s21
      %p32 = scmp.ge.s32.totalorder %s31, 2
      %s33 = scalar_select %p32, 0, %s31
      %s34 = ssub.s32 %s21, %s33
      %s35 = ssub.s32 %s22, %s29
      %s36 = sor.u32 %s34, %s35
      %p37 = scmp.eq.s32.totalorder %s36, 0
      %s39 = sadd.s32 %s38, 1
      %s40 = scalar_select %p37, %s38, %s39
      %p43 = pneg %p37
      %p44 = scmp.eq.s32.totalorder %s14, 1
      %p45 = por %p43, %p44
      %p46 = scmp.ne.s32.totalorder %s38, %s41
      %p47 = scmp.eq.s32.totalorder %s14, 0
      %p48 = por %p46, %p47
      %p49 = scmp.ne.s32.totalorder %s38, %s41
      %p50 = scmp.eq.s32.totalorder %s19, 1
      %p51 = por %p49, %p50
      %p52 = scmp.ne.s32.totalorder %s41, %s42
      %p53 = scmp.eq.s32.totalorder %s19, 0
      %p54 = por %p52, %p53
      %p55 = scmp.ne.s32.totalorder %s41, %s42
      %p56 = scmp.eq.s32.totalorder %s20, 1
      %p57 = por %p55, %p56
      %p59 = scmp.ne.s32.totalorder %s42, %s58
      %p60 = scmp.eq.s32.totalorder %s20, 0
      %p61 = por %p59, %p60
      %s63 = sadd.s32 %s62, 1
      %p66 = scmp.eq.s32.totalorder %s14, 1
      %p67 = scmp.ne.s32.totalorder %s62, %s64
      %p68 = scmp.eq.s32.totalorder %s14, 0
      %p69 = por %p67, %p68
      %p70 = scmp.ne.s32.totalorder %s62, %s64
      %p71 = scmp.eq.s32.totalorder %s19, 1
      %p72 = por %p70, %p71
      %p73 = scmp.ne.s32.totalorder %s64, %s65
      %p74 = scmp.eq.s32.totalorder %s19, 0
      %p75 = por %p73, %p74
      %p76 = scmp.ne.s32.totalorder %s64, %s65
      %p77 = scmp.eq.s32.totalorder %s20, 1
      %p78 = por %p76, %p77
      %p80 = scmp.ne.s32.totalorder %s65, %s79
      %p81 = scmp.eq.s32.totalorder %s20, 0
      %p82 = por %p80, %p81
      %s84 = sadd.s32 %s83, 1
      %p87 = scmp.eq.s32.totalorder %s14, 1
      %p88 = scmp.ne.s32.totalorder %s83, %s85
      %p89 = scmp.eq.s32.totalorder %s14, 0
      %p90 = por %p88, %p89
      %p91 = scmp.ne.s32.totalorder %s83, %s85
      %p92 = scmp.eq.s32.totalorder %s19, 1
      %p93 = por %p91, %p92
      %p94 = scmp.ne.s32.totalorder %s85, %s86
      %p95 = scmp.eq.s32.totalorder %s19, 0
      %p96 = por %p94, %p95
      %p97 = scmp.ne.s32.totalorder %s85, %s86
      %p98 = scmp.eq.s32.totalorder %s20, 1
      %p99 = por %p97, %p98
      %p101 = scmp.ne.s32.totalorder %s86, %s100
      %p102 = scmp.eq.s32.totalorder %s20, 0
      %p103 = por %p101, %p102
      %s105 = sadd.s32 %s104, 1
      %p108 = scmp.eq.s32.totalorder %s14, 1
      %p109 = scmp.ne.s32.totalorder %s104, %s106
      %p110 = scmp.eq.s32.totalorder %s14, 0
      %p111 = por %p109, %p110
      %p112 = scmp.ne.s32.totalorder %s104, %s106
      %p113 = scmp.eq.s32.totalorder %s19, 1
      %p114 = por %p112, %p113
      %p115 = scmp.ne.s32.totalorder %s106, %s107
      %p116 = scmp.eq.s32.totalorder %s19, 0
      %p117 = por %p115, %p116
      %p118 = scmp.ne.s32.totalorder %s106, %s107
      %p119 = scmp.eq.s32.totalorder %s20, 1
      %p120 = por %p118, %p119
      %p122 = scmp.ne.s32.totalorder %s107, %s121
      %p123 = scmp.eq.s32.totalorder %s20, 0
      %p124 = por %p122, %p123
      %s126 = sadd.s32 %s125, 1
      %p129 = scmp.eq.s32.totalorder %s14, 1
      %p130 = scmp.ne.s32.totalorder %s125, %s127
      %p131 = scmp.eq.s32.totalorder %s14, 0
      %p132 = por %p130, %p131
      %p133 = scmp.ne.s32.totalorder %s125, %s127
      %p134 = scmp.eq.s32.totalorder %s19, 1
      %p135 = por %p133, %p134
      %p136 = scmp.ne.s32.totalorder %s127, %s128
      %p137 = scmp.eq.s32.totalorder %s19, 0
      %p138 = por %p136, %p137
      %p139 = scmp.ne.s32.totalorder %s127, %s128
      %p140 = scmp.eq.s32.totalorder %s20, 1
      %p141 = por %p139, %p140
      %p143 = scmp.ne.s32.totalorder %s128, %s142
      %p144 = scmp.eq.s32.totalorder %s20, 0
      %p145 = por %p143, %p144
      %s146 = ssub.s32 %s21, %s33
      %s147 = ssub.s32 %s22, %s29
      %s148 = sor.u32 %s146, %s147
      %p149 = scmp.eq.s32.totalorder %s148, 0
      %s151 = sadd.s32 %s150, 1
      %s152 = scalar_select %p149, %s150, %s151
      %p155 = pneg %p149
      %p156 = scmp.eq.s32.totalorder %s14, 1
      %p157 = por %p155, %p156
      %p158 = scmp.ne.s32.totalorder %s150, %s153
      %p159 = scmp.eq.s32.totalorder %s14, 0
      %p160 = por %p158, %p159
      %p161 = scmp.ne.s32.totalorder %s150, %s153
      %p162 = scmp.eq.s32.totalorder %s19, 1
      %p163 = por %p161, %p162
      %p164 = scmp.ne.s32.totalorder %s153, %s154
      %p165 = scmp.eq.s32.totalorder %s19, 0
      %p166 = por %p164, %p165
      %p167 = scmp.ne.s32.totalorder %s153, %s154
      %p168 = scmp.eq.s32.totalorder %s20, 1
      %p169 = por %p167, %p168
      %p171 = scmp.ne.s32.totalorder %s154, %s170
      %p172 = scmp.eq.s32.totalorder %s20, 0
      %p173 = por %p171, %p172
      %p174 = scmp.le.s32.totalorder 1, %s14
      %p175 = scmp.lt.s32.totalorder %s14, 3
      %p176 = pnand %p174, %p175
      %p177 = pneg %p176
      // Predicated region
      $region9: #{tpu_custom_call.1} parent=5 // pred_check
        _
      $region10: #{tpu_custom_call.1} parent=5 // pred_check_branch
        %179 = sbr.rel (%p176) target = $region12
      $region11: #{tpu_custom_call.1} parent=5 // pred_region
        %s180 = ssub.s32 %s14, 1
        // Predicated region
        $region13: #{tpu_custom_call.1} parent=11 // pred_check
          %p181 = pneg %p75
        $region14: #{tpu_custom_call.1} parent=11 // pred_check_branch
          %183 = sbr.rel (%p181) target = $region16
        $region15: #{tpu_custom_call.1} parent=11 // pred_region
          _
        $region16: #{tpu_custom_call.1} parent=11 // pred_fallthru
          _
        // Predicated region
        $region17: #{tpu_custom_call.1} parent=11 // pred_check
          %p184 = pneg %p96
        $region18: #{tpu_custom_call.1} parent=11 // pred_check_branch
          %186 = sbr.rel (%p184) target = $region20
        $region19: #{tpu_custom_call.1} parent=11 // pred_region
          _
        $region20: #{tpu_custom_call.1} parent=11 // pred_fallthru
          _
        // Predicated region
        $region21: #{tpu_custom_call.1} parent=11 // pred_check
          %p187 = pneg %p117
        $region22: #{tpu_custom_call.1} parent=11 // pred_check_branch
          %189 = sbr.rel (%p187) target = $region24
        $region23: #{tpu_custom_call.1} parent=11 // pred_region
          _
        $region24: #{tpu_custom_call.1} parent=11 // pred_fallthru
          _
        // Predicated region
        $region25: #{tpu_custom_call.1} parent=11 // pred_check
          %p190 = pneg %p138
        $region26: #{tpu_custom_call.1} parent=11 // pred_check_branch
          %192 = sbr.rel (%p190) target = $region28
        $region27: #{tpu_custom_call.1} parent=11 // pred_region
          _
        $region28: #{tpu_custom_call.1} parent=11 // pred_fallthru
          _
      $region12: #{tpu_custom_call.1} parent=5 // pred_fallthru
        _
      %p193 = scmp.lt.s32.totalorder %s14, 2
      // Predicated region
      $region29: #{tpu_custom_call.1} parent=5 // pred_check
        %p194 = pneg %p193
      $region30: #{tpu_custom_call.1} parent=5 // pred_check_branch
        %196 = sbr.rel (%p194) target = $region32
      $region31: #{tpu_custom_call.1} parent=5 // pred_region
        // Predicated region
        $region33: #{tpu_custom_call.1} parent=31 // pred_check
          %p197 = pneg %p48
        $region34: #{tpu_custom_call.1} parent=31 // pred_check_branch
          %199 = sbr.rel (%p197) target = $region36
        $region35: #{tpu_custom_call.1} parent=31 // pred_region
          %s200 = smul.u32 2, %s22
          %p201 = scmp.lt.s32.totalorder %s21, 1
          %s202 = scalar_select %p201, %s21, 1
          %p203 = scmp.lt.s32.totalorder %s200, 1
          %s204 = scalar_select %p203, %s200, 1
          %s205 = smul.addr %s202, 2
          %s206 = sadd.s32 %s204, %s205
          %s207 = smul.addr %s206, 4
          %s208 = scalar_lea.vmem %s0, %s207
          %s209 = smul.u32 2, %s22
        $region36: #{tpu_custom_call.1} parent=31 // pred_fallthru
          _
      $region32: #{tpu_custom_call.1} parent=5 // pred_fallthru
        _
      %p210 = scmp.le.s32.totalorder 1, %s14
      %p211 = scmp.lt.s32.totalorder %s14, 3
      %p212 = pnand %p210, %p211
      %p213 = pneg %p212
      // Predicated region
      $region37: #{tpu_custom_call.1} parent=5 // pred_check
        _
      $region38: #{tpu_custom_call.1} parent=5 // pred_check_branch
        %215 = sbr.rel (%p212) target = $region40
      $region39: #{tpu_custom_call.1} parent=5 // pred_region
        %s216 = ssub.s32 %s14, 1
        %s217 = smul.u32 2, %s24
        %p218 = scmp.lt.s32.totalorder %s23, 1
        %s219 = scalar_select %p218, %s23, 1
        %p220 = scmp.lt.s32.totalorder %s217, 1
        %s221 = scalar_select %p220, %s217, 1
        %s222 = smul.addr %s219, 2
        %s223 = sadd.s32 %s221, %s222
        %s224 = smul.addr %s223, 4
        %s225 = scalar_lea.vmem %s0, %s224
        %p226 = pneg %p54
        %p227 = pneg %p51
        %p228 = pneg %p75
        %p229 = pneg %p72
        %p230 = pneg %p96
        %p231 = pneg %p93
        %p232 = pneg %p117
        %p233 = pneg %p114
        %p234 = pneg %p138
        %p235 = pneg %p135
        %p236 = pneg %p166
        %p237 = pneg %p163
        %s238 = sand.u32 %s153, 1
        %s239 = scalar_lea.sflag [#allocation4], %s238
        %s240 = sand.u32 %s153, 1
        %s241 = smul.addr %s240, 8
        %s242 = scalar_lea.vmem [#allocation3], %s241
        %s243 = smul.u32 2, %s24
        %p244 = scmp.lt.s32.totalorder %s23, 1
        %s245 = scalar_select %p244, %s23, 1
        %p246 = scmp.lt.s32.totalorder %s243, 1
        %s247 = scalar_select %p246, %s243, 1
        %s248 = smul.addr %s245, 2
        %s249 = sadd.s32 %s247, %s248
        %s250 = smul.addr %s249, 4
        %s251 = scalar_lea.vmem %s0, %s250
        %s252 = smul.u32 2, %s24
        %s253 = smul.u32 2, %s24
        %v254 = vld [vmem:[%s4] sm:$0xf]
        %v255 = vld [vmem:[%s251] sm:$0xff]
        %v256 = vld [vmem:[%s1] sm:$0xff]
        %v257 = vld [vmem:[%s1 + $0x8] sm:$0xff]
        %v258 = vld [vmem:[%s1 + $0x10] sm:$0xff]
        %v259 = vld [vmem:[%s1 + $0x18] sm:$0xff]
        %v260 = vld [vmem:[%s2] sm:$0xff]
        %v261 = vld [vmem:[%s2 + $0x8] sm:$0xff]
        %v262 = vld [vmem:[%s2 + $0x10] sm:$0xff]
        %v263 = vld [vmem:[%s2 + $0x18] sm:$0xff]
        %265 = vset.pattern.permute.xlu0 0
        %266 = vperm.xlu0 %265, %v260
        %v267 = vpop.permute.xlu0 %266
        %270 = vset.pattern.permute.xlu0 0
        %271 = vperm.xlu0 %270, %v261
        %v272 = vpop.permute.xlu0 %271
        %275 = vset.pattern.permute.xlu0 0
        %276 = vperm.xlu0 %275, %v262
        %v277 = vpop.permute.xlu0 %276
        %280 = vset.pattern.permute.xlu0 0
        %281 = vperm.xlu0 %280, %v263
        %v282 = vpop.permute.xlu0 %281
        %v285 = vcombine.high %v255, %v255
        %vm286 = vcmask 31744
        %v288 = vsel %vm286, %v256, 0
        %v291 = vsel %vm286, %v257, 0
        %v294 = vsel %vm286, %v258, 0
        %v297 = vsel %vm286, %v259, 0
        %vm299 = vcmask 1043456
        %v300 = vsel %vm299, %v255, 0
        %v302 = vsel %vm299, %v285, 0
        %304 = vmatprep.subr.mxu0 %v302
        %305 = vmatpush1.msra.mxu0 %v300
        %306 = vmatprep.subr.mxu0 0.0
        %307 = vmatpush1.msra.mxu0 0.0
        %308 = vmatprep.subr.mxu0 0.0
        %309 = vmatpush1.msra.mxu0 0.0
        %310 = vmatprep.subr.mxu0 0.0
        %311 = vmatpush1.msra.mxu0 0.0
        %312 = vmatprep.subr.mxu0 0.0
        %313 = vmatpush1.msra.mxu0 0.0
        %314 = vmatprep.subr.mxu0 0.0
        %315 = vmatpush1.msra.mxu0 0.0
        %316 = vmatprep.subr.mxu0 0.0
        %317 = vmatpush1.msra.mxu0 0.0
        %318 = vmatprep.subr.mxu0 0.0
        %319 = vmatpush1.msra.mxu0 0.0
        %320 = vmatprep.subr.mxu0 0.0
        %321 = vmatpush1.msra.mxu0 0.0
        %322 = vmatprep.subr.mxu0 0.0
        %323 = vmatpush1.msra.mxu0 0.0
        %324 = vmatprep.subr.mxu0 0.0
        %325 = vmatpush1.msra.mxu0 0.0
        %326 = vmatprep.subr.mxu0 0.0
        %327 = vmatpush1.msra.mxu0 0.0
        %328 = vmatprep.subr.mxu0 0.0
        %329 = vmatpush1.msra.mxu0 0.0
        %330 = vmatprep.subr.mxu0 0.0
        %331 = vmatpush1.msra.mxu0 0.0
        %332 = vmatprep.subr.mxu0 0.0
        %333 = vmatpush1.msra.mxu0 0.0
        %334 = vmatprep.subr.mxu0 0.0
        %335 = vmatpush1.msra.mxu0 0.0
        %336 = vmatprep.subr.mxu0 0.0
        %337 = vmatpush1.msra.mxu0 0.0
        %338 = vmatprep.subr.mxu0 0.0
        %339 = vmatpush1.msra.mxu0 0.0
        %340 = vmatprep.subr.mxu0 0.0
        %341 = vmatpush1.msra.mxu0 0.0
        %342 = vmatprep.subr.mxu0 0.0
        %343 = vmatpush1.msra.mxu0 0.0
        %344 = vmatprep.subr.mxu0 0.0
        %345 = vmatpush1.msra.mxu0 0.0
        %346 = vmatprep.subr.mxu0 0.0
        %347 = vmatpush1.msra.mxu0 0.0
        %348 = vmatprep.subr.mxu0 0.0
        %349 = vmatpush1.msra.mxu0 0.0
        %350 = vmatprep.subr.mxu0 0.0
        %351 = vmatpush1.msra.mxu0 0.0
        %352 = vmatprep.subr.mxu0 0.0
        %353 = vmatpush1.msra.mxu0 0.0
        %354 = vmatprep.subr.mxu0 0.0
        %355 = vmatpush1.msra.mxu0 0.0
        %356 = vmatprep.subr.mxu0 0.0
        %357 = vmatpush1.msra.mxu0 0.0
        %358 = vmatprep.subr.mxu0 0.0
        %359 = vmatpush1.msra.mxu0 0.0
        %360 = vmatprep.subr.mxu0 0.0
        %361 = vmatpush1.msra.mxu0 0.0
        %362 = vmatprep.subr.mxu0 0.0
        %363 = vmatpush1.msra.mxu0 0.0
        %364 = vmatprep.subr.mxu0 0.0
        %365 = vmatpush1.msra.mxu0 0.0
        %366 = vmatprep.subr.mxu0 0.0
        %367 = vmatpush1.msra.mxu0 0.0
        %368 = vmatprep.mubr.f32.mxu0 0.0
        %369 = vmatmul.mubr.f32.gmra.mrb[0].mxu0 %v288
        %v370 = vpop.f32.mrb[0].mxu0
        %v371 = vadd.f32 %v267, %v370
        %v372 = vpop.f32.mrb[0].mxu0
        %v373 = vadd.f32 %v267, %v372
        %374 = vmatprep.mubr.f32.mxu0 0.0
        %375 = vmatmul.mubr.f32.gmra.mrb[0].mxu0 %v291
        %v376 = vpop.f32.mrb[0].mxu0
        %v377 = vadd.f32 %v272, %v376
        %v378 = vpop.f32.mrb[0].mxu0
        %v379 = vadd.f32 %v272, %v378
        %380 = vmatprep.mubr.f32.mxu0 0.0
        %381 = vmatmul.mubr.f32.gmra.mrb[0].mxu0 %v294
        %v382 = vpop.f32.mrb[0].mxu0
        %v383 = vadd.f32 %v277, %v382
        %v384 = vpop.f32.mrb[0].mxu0
        %v385 = vadd.f32 %v277, %v384
        %386 = vmatprep.mubr.f32.mxu0 0.0
        %387 = vmatmul.mubr.f32.gmra.mrb[0].mxu0 %v297
        %v388 = vpop.f32.mrb[0].mxu0
        %v389 = vadd.f32 %v282, %v388
        %v390 = vpop.f32.mrb[0].mxu0
        %v391 = vadd.f32 %v282, %v390
        %392 = vdwg.mxu0
        %v393 = vmul.f32 %v371, 0.5
        %v394 = vmul.f32 %v373, 0.5
        %v395 = vmul.f32 %v377, 0.5
        %v396 = vmul.f32 %v379, 0.5
        %v397 = vmul.f32 %v383, 0.5
        %v398 = vmul.f32 %v385, 0.5
        %v399 = vmul.f32 %v389, 0.5
        %v400 = vmul.f32 %v391, 0.5
        %v401 = vmul.f32 %v371, 0.70710677
        %v402 = vmul.f32 %v373, 0.70710677
        %v403 = vmul.f32 %v377, 0.70710677
        %v404 = vmul.f32 %v379, 0.70710677
        %v405 = vmul.f32 %v383, 0.70710677
        %v406 = vmul.f32 %v385, 0.70710677
        %v407 = vmul.f32 %v389, 0.70710677
        %v408 = vmul.f32 %v391, 0.70710677
        %v409 = verf.f32.pop %v401
        %v410 = verf.f32.pop %v402
        %v411 = verf.f32.pop %v403
        %v412 = verf.f32.pop %v404
        %v413 = verf.f32.pop %v405
        %v414 = verf.f32.pop %v406
        %v415 = verf.f32.pop %v407
        %v416 = verf.f32.pop %v408
        %v417 = vadd.f32 %v409, 1.0
        %v418 = vadd.f32 %v410, 1.0
        %v419 = vadd.f32 %v411, 1.0
        %v420 = vadd.f32 %v412, 1.0
        %v421 = vadd.f32 %v413, 1.0
        %v422 = vadd.f32 %v414, 1.0
        %v423 = vadd.f32 %v415, 1.0
        %v424 = vadd.f32 %v416, 1.0
        %v425 = vmul.f32 %v393, %v417
        %v426 = vmul.f32 %v394, %v418
        %v427 = vmul.f32 %v395, %v419
        %v428 = vmul.f32 %v396, %v420
        %v429 = vmul.f32 %v397, %v421
        %v430 = vmul.f32 %v398, %v422
        %v431 = vmul.f32 %v399, %v423
        %v432 = vmul.f32 %v400, %v424
        %v433 = vld [vmem:[%s3] sm:$0xf]
        %vm434 = vcmask 261120
        %v436 = vsel %vm434, %v433, 0
        %438 = vmatprep.subr.mxu0 %v426
        %439 = vmatpush1.msra.mxu0 %v425
        %440 = vmatprep.subr.mxu0 %v428
        %441 = vmatpush1.msra.mxu0 %v427
        %442 = vmatprep.subr.mxu0 %v430
        %443 = vmatpush1.msra.mxu0 %v429
        %444 = vmatprep.subr.mxu0 %v432
        %445 = vmatpush1.msra.mxu0 %v431
        %446 = vmatprep.subr.mxu0 0.0
        %447 = vmatpush1.msra.mxu0 0.0
        %448 = vmatprep.subr.mxu0 0.0
        %449 = vmatpush1.msra.mxu0 0.0
        %450 = vmatprep.subr.mxu0 0.0
        %451 = vmatpush1.msra.mxu0 0.0
        %452 = vmatprep.subr.mxu0 0.0
        %453 = vmatpush1.msra.mxu0 0.0
        %454 = vmatprep.subr.mxu0 0.0
        %455 = vmatpush1.msra.mxu0 0.0
        %456 = vmatprep.subr.mxu0 0.0
        %457 = vmatpush1.msra.mxu0 0.0
        %458 = vmatprep.subr.mxu0 0.0
        %459 = vmatpush1.msra.mxu0 0.0
        %460 = vmatprep.subr.mxu0 0.0
        %461 = vmatpush1.msra.mxu0 0.0
        %462 = vmatprep.subr.mxu0 0.0
        %463 = vmatpush1.msra.mxu0 0.0
        %464 = vmatprep.subr.mxu0 0.0
        %465 = vmatpush1.msra.mxu0 0.0
        %466 = vmatprep.subr.mxu0 0.0
        %467 = vmatpush1.msra.mxu0 0.0
        %468 = vmatprep.subr.mxu0 0.0
        %469 = vmatpush1.msra.mxu0 0.0
        %470 = vmatprep.subr.mxu0 0.0
        %471 = vmatpush1.msra.mxu0 0.0
        %472 = vmatprep.subr.mxu0 0.0
        %473 = vmatpush1.msra.mxu0 0.0
        %474 = vmatprep.subr.mxu0 0.0
        %475 = vmatpush1.msra.mxu0 0.0
        %476 = vmatprep.subr.mxu0 0.0
        %477 = vmatpush1.msra.mxu0 0.0
        %478 = vmatprep.subr.mxu0 0.0
        %479 = vmatpush1.msra.mxu0 0.0
        %480 = vmatprep.subr.mxu0 0.0
        %481 = vmatpush1.msra.mxu0 0.0
        %482 = vmatprep.subr.mxu0 0.0
        %483 = vmatpush1.msra.mxu0 0.0
        %484 = vmatprep.subr.mxu0 0.0
        %485 = vmatpush1.msra.mxu0 0.0
        %486 = vmatprep.subr.mxu0 0.0
        %487 = vmatpush1.msra.mxu0 0.0
        %488 = vmatprep.subr.mxu0 0.0
        %489 = vmatpush1.msra.mxu0 0.0
        %490 = vmatprep.subr.mxu0 0.0
        %491 = vmatpush1.msra.mxu0 0.0
        %492 = vmatprep.subr.mxu0 0.0
        %493 = vmatpush1.msra.mxu0 0.0
        %494 = vmatprep.subr.mxu0 0.0
        %495 = vmatpush1.msra.mxu0 0.0
        %496 = vmatprep.subr.mxu0 0.0
        %497 = vmatpush1.msra.mxu0 0.0
        %498 = vmatprep.subr.mxu0 0.0
        %499 = vmatpush1.msra.mxu0 0.0
        %500 = vmatprep.subr.mxu0 0.0
        %501 = vmatpush1.msra.mxu0 0.0
        %502 = vmatprep.mubr.f32.mxu0 0.0
        %503 = vmatmul.mubr.f32.gmra.mrb[0].mxu0 %v436
        %v504 = vpop.f32.mrb[0].mxu0
        %v505 = vadd.f32 0.0, %v504
        %v506 = vpop.f32.mrb[0].mxu0
        %v507 = vadd.f32 0.0, %v506
        %508 = vdwg.mxu0
        %v511 = vcombine.low %v505, %v507
        %513 = vst [vmem:[#allocation2] sm:$0xff] %v511
        %v514 = vld [vmem:[#allocation2] sm:$0xff]
        %516 = vset.pattern.permute.xlu0 0
        %517 = vperm.xlu0 %516, %v254
        %v518 = vpop.permute.xlu0 %517
        %v520 = vunpack.c.l.s4 839922192
        %v521 = vunpack.c.0.s8 %v520
        %v522 = vlaneseq
        %v523 = vshrl.u32 %v522, 7
        %v524 = vsub.s32 %v521, %v523
        %v525 = vrot.slane %v518, %v524
        %v527 = vadd.f32 %v514, %v525
        %528 = vst [vmem:[%s242] sm:$0xff] %v527
        %s529 = sand.u32 %s153, 1
        %s530 = scalar_lea.sflag [#allocation4], %s529
        %s531 = sand.u32 %s153, 1
        %s532 = smul.addr %s531, 8
        %s533 = scalar_lea.vmem [#allocation3], %s532
        // Predicated region
        $region41: #{tpu_custom_call.1} parent=39 // pred_check
          %p534 = pneg %p163
        $region42: #{tpu_custom_call.1} parent=39 // pred_check_branch
          %536 = sbr.rel (%p534) target = $region44
        $region43: #{tpu_custom_call.1} parent=39 // pred_region
          %s537 = smul.u32 2, %s24
          %s539 = ssub.s32 128, 128
          %540 = vsyncadd %s530, %s539
          %s541 = smul.addr %s23, 2
          %s542 = sadd.s32 %s537, %s541
          %s543 = smul.addr %s542, 64
          %s544 = scalar_lea.hbm %s5, %s543
          %s546 = sshll.u32 %s533, 4
          %s547 = int_to_ptr.vmem [resolvable:$true] %s546
          %549 = dma.vmem_to_hbm [thread:$0]  %s547, 128, %s544, %s530
        $region44: #{tpu_custom_call.1} parent=39 // pred_fallthru
          _
      $region40: #{tpu_custom_call.1} parent=5 // pred_fallthru
        _
      %p550 = scmp.le.s32.totalorder 2, %s14
      // Predicated region
      $region45: #{tpu_custom_call.1} parent=5 // pred_check
        %p551 = pneg %p550
      $region46: #{tpu_custom_call.1} parent=5 // pred_check_branch
        %553 = sbr.rel (%p551) target = $region48
      $region47: #{tpu_custom_call.1} parent=5 // pred_region
        %s554 = ssub.s32 %s14, 2
        // Predicated region
        $region49: #{tpu_custom_call.1} parent=47 // pred_check
          %p555 = pneg %p169
        $region50: #{tpu_custom_call.1} parent=47 // pred_check_branch
          %557 = sbr.rel (%p555) target = $region52
        $region51: #{tpu_custom_call.1} parent=47 // pred_region
          %s558 = sand.u32 %s154, 1
          %s559 = scalar_lea.sflag [#allocation4], %s558
          %s560 = sand.u32 %s154, 1
          %s561 = smul.addr %s560, 8
          %s562 = scalar_lea.vmem [#allocation3], %s561
          %563 = dma.done %s559, 128
        $region52: #{tpu_custom_call.1} parent=47 // pred_fallthru
          _
      $region48: #{tpu_custom_call.1} parent=5 // pred_fallthru
        _
    $region6: #{tpu_custom_call.1} parent=1 // loop_footer
      %s18 = sadd.s32 1, %s14
    $region7: #{tpu_custom_call.1} parent=1 // loop_footer_branch
      %13 = sbr.rel target = $region3
    $region8: #{tpu_custom_call.1} parent=1 // loop_exit
      _
    %564 = vsyncpa [#allocation4], 1
    %s565 = scalar_lea.sflag [#allocation4], 1
    %566 = vsyncpa %s565, 1

</llo_original>
